<compile_context>
chip_gen: v7x
topology: tpu7x:2x2x1
jax: 0.10.0
libtpu: 0.0.40
codegen_flags: <defaults>
</compile_context>

<pallas_src>
import math

import jax
import jax.numpy as jnp
from jax.experimental import pallas as pl
from jax.experimental.pallas import tpu as pltpu

_LANE = 128
_ROW_GRAN = 16          # multiple of both f32 (8) and bf16 (16) sublane tiling


# ----------------------------------------------------------------------------
# Small helpers
# ----------------------------------------------------------------------------
def _rup(x, m):
    return ((x + m - 1) // m) * m


def _itemsize(dt):
    return jnp.dtype(dt).itemsize


def _vmem_limit_bytes():
    """Generation-aware VMEM limit: ~112 MiB on v5e/v6e (128 MiB physical),
    ~56 MiB on v7x (64 MiB physical per TensorCore)."""
    try:
        cap = int(pltpu.get_tpu_info().vmem_capacity_bytes)
    except Exception:
        cap = 64 * 1024 * 1024          # conservative fallback
    return int(min(cap - 8 * 1024 * 1024, 112 * 1024 * 1024))


def _row_tile(m, tm):
    """Row tile: multiple of 16, never (much) larger than needed for m rows."""
    t = max(_ROW_GRAN, min(tm, _rup(m, _ROW_GRAN)))
    return t - (t % _ROW_GRAN)


def _lane_tile(d, tn):
    """Largest multiple of 128 <= tn that divides d (requires d % 128 == 0)."""
    t = min(max(tn, _LANE), d)
    t -= t % _LANE
    while d % t:
        t -= _LANE
    return t


# ----------------------------------------------------------------------------
# Kernels
# ----------------------------------------------------------------------------
def _linear_kernel(x_ref, w_ref, b_ref, o_ref):
    """o = x @ w + b for one row tile (bf16 operands, f32 accumulation)."""
    acc = jnp.dot(x_ref[...].astype(jnp.bfloat16), w_ref[...],
                  preferred_element_type=jnp.float32)
    o_ref[...] = (acc + b_ref[...]).astype(o_ref.dtype)


def _make_fused_resident_kernel(dk):
    """Down-projection + single fused KV up-projection (resident weights)."""
    def kernel(h_ref, wd_ref, bd_ref, wkv_ref, bkv_ref, c_ref, k_ref, v_ref):
        c = (jnp.dot(h_ref[...].astype(jnp.bfloat16), wd_ref[...],
                     preferred_element_type=jnp.float32)
             + bd_ref[...]).astype(jnp.bfloat16)
        c_ref[...] = c.astype(c_ref.dtype)
        kv = (jnp.dot(c, wkv_ref[...], preferred_element_type=jnp.float32)
              + bkv_ref[...])
        k_ref[...] = kv[:, :dk].astype(k_ref.dtype)     # lane-aligned split
        v_ref[...] = kv[:, dk:].astype(v_ref.dtype)
    return kernel


def _fused_tiled_kernel(h_ref, wd_ref, bd_ref, wk_ref, bk_ref, wv_ref, bv_ref,
                        c_ref, k_ref, v_ref):
    """Fallback: Dout-tiled up-projection; latent carried in the resident
    c output block (written at j == 0, read back for j > 0)."""
    @pl.when(pl.program_id(1) == 0)
    def _():
        acc = jnp.dot(h_ref[...].astype(jnp.bfloat16), wd_ref[...],
                      preferred_element_type=jnp.float32) + bd_ref[...]
        c_ref[...] = acc.astype(c_ref.dtype)

    c = c_ref[...].astype(jnp.bfloat16)
    k_ref[...] = (jnp.dot(c, wk_ref[...], preferred_element_type=jnp.float32)
                  + bk_ref[...]).astype(k_ref.dtype)
    v_ref[...] = (jnp.dot(c, wv_ref[...], preferred_element_type=jnp.float32)
                  + bv_ref[...]).astype(v_ref.dtype)


def _make_dual_resident_kernel(dk):
    """k/v up-projection over an existing latent, single fused KV dot."""
    def kernel(c_ref, wkv_ref, bkv_ref, k_ref, v_ref):
        c = c_ref[...].astype(jnp.bfloat16)
        kv = (jnp.dot(c, wkv_ref[...], preferred_element_type=jnp.float32)
              + bkv_ref[...])
        k_ref[...] = kv[:, :dk].astype(k_ref.dtype)
        v_ref[...] = kv[:, dk:].astype(v_ref.dtype)
    return kernel


def _dual_tiled_kernel(c_ref, wk_ref, bk_ref, wv_ref, bv_ref, k_ref, v_ref):
    c = c_ref[...].astype(jnp.bfloat16)
    k_ref[...] = (jnp.dot(c, wk_ref[...], preferred_element_type=jnp.float32)
                  + bk_ref[...]).astype(k_ref.dtype)
    v_ref[...] = (jnp.dot(c, wv_ref[...], preferred_element_type=jnp.float32)
                  + bv_ref[...]).astype(v_ref.dtype)


# ----------------------------------------------------------------------------
# Pallas wrappers
# ----------------------------------------------------------------------------
def linear_pallas(x2d, w, b, *, tm=256, out_dtype=jnp.bfloat16):
    """x2d: [M, Din], w: [Din, Dout], b: [1, Dout] -> [M, Dout] (out_dtype)."""
    M, Din = x2d.shape
    Dout = w.shape[1]
    tm_eff = _row_tile(M, tm)
    gm = pl.cdiv(M, tm_eff)
    limit = _vmem_limit_bytes()
    cost = pl.CostEstimate(
        flops=2 * M * Din * Dout, transcendentals=0,
        bytes_accessed=(M * Din * _itemsize(x2d.dtype) + Din * Dout * 2
                        + Dout * 4 + M * Dout * _itemsize(out_dtype)))
    return pl.pallas_call(
        _linear_kernel,
        out_shape=jax.ShapeDtypeStruct((M, Dout), out_dtype),
        grid=(gm,),
        in_specs=[
            pl.BlockSpec((tm_eff, Din), lambda i: (i, 0)),
            pl.BlockSpec((Din, Dout), lambda i: (0, 0)),    # resident weight
            pl.BlockSpec((1, Dout), lambda i: (0, 0)),
        ],
        out_specs=pl.BlockSpec((tm_eff, Dout), lambda i: (i, 0)),
        compiler_params=pltpu.CompilerParams(
            dimension_semantics=("parallel",), vmem_limit_bytes=limit),
        cost_estimate=cost,
    )(x2d, w.astype(jnp.bfloat16), b.astype(jnp.float32))


def fused_down_up_pallas(h2d, params, *, tm=256, tn=512,
                         out_dtype=jnp.bfloat16, force_tiled=False):
    """h2d: [M, Dm] -> (c: [M, Dl], k: [M, Dk], v: [M, Dv]) in one pallas_call."""
    wd, bd = params["w_dkv"], params["b_dkv"]
    wk, bk = params["w_uk"], params["b_uk"]
    wv, bv = params["w_uv"], params["b_uv"]
    wkv, bkv = params["w_ukv"], params["b_ukv"]
    M, Dm = h2d.shape
    Dl, Dk, Dv = wd.shape[1], wk.shape[1], wv.shape[1]
    hb, ob = _itemsize(h2d.dtype), _itemsize(out_dtype)
    limit = _vmem_limit_bytes()

    def resident_bytes(t):
        blk = (t * Dm * hb + Dm * Dl * 2 + Dl * 4
               + Dl * (Dk + Dv) * 2 + (Dk + Dv) * 4
               + t * (Dl + Dk + Dv) * ob)
        return 2 * blk          # conservative: assume every block double-buffered

    tm_eff = _row_tile(M, tm)
    while tm_eff > 64 and resident_bytes(tm_eff) > limit:
        tm_eff = _row_tile(M, tm_eff // 2)
    gm = pl.cdiv(M, tm_eff)
    use_resident = ((not force_tiled) and Dk % _LANE == 0
                    and resident_bytes(tm_eff) <= limit)

    cost = pl.CostEstimate(
        flops=2 * M * Dl * (Dm + Dk + Dv), transcendentals=0,
        bytes_accessed=(M * Dm * hb + (Dm * Dl + Dl * (Dk + Dv)) * 2
                        + (Dl + Dk + Dv) * 4 + M * (Dl + Dk + Dv) * ob))
    out_shapes = (jax.ShapeDtypeStruct((M, Dl), out_dtype),
                  jax.ShapeDtypeStruct((M, Dk), out_dtype),
                  jax.ShapeDtypeStruct((M, Dv), out_dtype))

    if use_resident:
        return pl.pallas_call(
            _make_fused_resident_kernel(Dk),
            out_shape=out_shapes,
            grid=(gm,),
            in_specs=[
                pl.BlockSpec((tm_eff, Dm), lambda i: (i, 0)),
                pl.BlockSpec((Dm, Dl), lambda i: (0, 0)),        # resident
                pl.BlockSpec((1, Dl), lambda i: (0, 0)),
                pl.BlockSpec((Dl, Dk + Dv), lambda i: (0, 0)),   # resident
                pl.BlockSpec((1, Dk + Dv), lambda i: (0, 0)),
            ],
            out_specs=(pl.BlockSpec((tm_eff, Dl), lambda i: (i, 0)),
                       pl.BlockSpec((tm_eff, Dk), lambda i: (i, 0)),
                       pl.BlockSpec((tm_eff, Dv), lambda i: (i, 0))),
            compiler_params=pltpu.CompilerParams(
                dimension_semantics=("parallel",), vmem_limit_bytes=limit),
            cost_estimate=cost,
        )(h2d, wd.astype(jnp.bfloat16), bd.astype(jnp.float32),
          wkv.astype(jnp.bfloat16), bkv.astype(jnp.float32))

    # Fallback: weights too large for VMEM (or forced) -> tile the Dout axis.
    if Dk == Dv and Dk % _LANE == 0:
        tn_k = tn_v = _lane_tile(Dk, tn)
        nj = Dk // tn_k
    else:
        # TODO(synk): independent Dout tiling when d_k != d_v or heads are not
        # 128-aligned; falls back to full-width up-projection blocks here.
        tn_k, tn_v, nj = Dk, Dv, 1

    return pl.pallas_call(
        _fused_tiled_kernel,
        out_shape=out_shapes,
        grid=(gm, nj),                       # j innermost & sequential (c carry)
        in_specs=[
            pl.BlockSpec((tm_eff, Dm), lambda i, j: (i, 0)),
            pl.BlockSpec((Dm, Dl), lambda i, j: (0, 0)),
            pl.BlockSpec((1, Dl), lambda i, j: (0, 0)),
            pl.BlockSpec((Dl, tn_k), lambda i, j: (0, j)),
            pl.BlockSpec((1, tn_k), lambda i, j: (0, j)),
            pl.BlockSpec((Dl, tn_v), lambda i, j: (0, j)),
            pl.BlockSpec((1, tn_v), lambda i, j: (0, j)),
        ],
        out_specs=(pl.BlockSpec((tm_eff, Dl), lambda i, j: (i, 0)),
                   pl.BlockSpec((tm_eff, tn_k), lambda i, j: (i, j)),
                   pl.BlockSpec((tm_eff, tn_v), lambda i, j: (i, j))),
        compiler_params=pltpu.CompilerParams(
            # j must stay "arbitrary": latent is written at j==0 into the
            # resident c output block and read back for j>0.
            # TODO(synk): on v7x in this weight-streaming regime, splitting the
            # j range across the two TensorCores would halve chip-level weight
            # HBM traffic (leading size-2 core axis, duplicated down-proj).
            dimension_semantics=("parallel", "arbitrary"),
            vmem_limit_bytes=limit),
        cost_estimate=cost,
    )(h2d, wd.astype(jnp.bfloat16), bd.astype(jnp.float32),
      wk.astype(jnp.bfloat16), bk.astype(jnp.float32),
      wv.astype(jnp.bfloat16), bv.astype(jnp.float32))


def dual_up_pallas(c2d, params, *, tm=256, tn=512,
                   out_dtype=jnp.bfloat16, force_tiled=False):
    """c2d: [M, Dl] -> (k: [M, Dk], v: [M, Dv]) reading the latent once."""
    wk, bk = params["w_uk"], params["b_uk"]
    wv, bv = params["w_uv"], params["b_uv"]
    wkv, bkv = params["w_ukv"], params["b_ukv"]
    M, Dl = c2d.shape
    Dk, Dv = wk.shape[1], wv.shape[1]
    cb, ob = _itemsize(c2d.dtype), _itemsize(out_dtype)
    limit = _vmem_limit_bytes()

    def resident_bytes(t):
        blk = (t * Dl * cb + Dl * (Dk + Dv) * 2 + (Dk + Dv) * 4
               + t * (Dk + Dv) * ob)
        return 2 * blk

    tm_eff = _row_tile(M, tm)
    while tm_eff > 64 and resident_bytes(tm_eff) > limit:
        tm_eff = _row_tile(M, tm_eff // 2)
    gm = pl.cdiv(M, tm_eff)
    use_resident = ((not force_tiled) and Dk % _LANE == 0
                    and resident_bytes(tm_eff) <= limit)

    cost = pl.CostEstimate(
        flops=2 * M * Dl * (Dk + Dv), transcendentals=0,
        bytes_accessed=(M * Dl * cb + Dl * (Dk + Dv) * 2 + (Dk + Dv) * 4
                        + M * (Dk + Dv) * ob))
    out_shapes = (jax.ShapeDtypeStruct((M, Dk), out_dtype),
                  jax.ShapeDtypeStruct((M, Dv), out_dtype))

    if use_resident:
        return pl.pallas_call(
            _make_dual_resident_kernel(Dk),
            out_shape=out_shapes,
            grid=(gm,),
            in_specs=[
                pl.BlockSpec((tm_eff, Dl), lambda i: (i, 0)),
                pl.BlockSpec((Dl, Dk + Dv), lambda i: (0, 0)),   # resident
                pl.BlockSpec((1, Dk + Dv), lambda i: (0, 0)),
            ],
            out_specs=(pl.BlockSpec((tm_eff, Dk), lambda i: (i, 0)),
                       pl.BlockSpec((tm_eff, Dv), lambda i: (i, 0))),
            compiler_params=pltpu.CompilerParams(
                dimension_semantics=("parallel",), vmem_limit_bytes=limit),
            cost_estimate=cost,
        )(c2d, wkv.astype(jnp.bfloat16), bkv.astype(jnp.float32))

    if Dk == Dv and Dk % _LANE == 0:
        tn_k = tn_v = _lane_tile(Dk, tn)
        nj = Dk // tn_k
    else:
        tn_k, tn_v, nj = Dk, Dv, 1

    return pl.pallas_call(
        _dual_tiled_kernel,
        out_shape=out_shapes,
        grid=(gm, nj),
        in_specs=[
            pl.BlockSpec((tm_eff, Dl), lambda i, j: (i, 0)),
            pl.BlockSpec((Dl, tn_k), lambda i, j: (0, j)),
            pl.BlockSpec((1, tn_k), lambda i, j: (0, j)),
            pl.BlockSpec((Dl, tn_v), lambda i, j: (0, j)),
            pl.BlockSpec((1, tn_v), lambda i, j: (0, j)),
        ],
        out_specs=(pl.BlockSpec((tm_eff, tn_k), lambda i, j: (i, j)),
                   pl.BlockSpec((tm_eff, tn_v), lambda i, j: (i, j))),
        compiler_params=pltpu.CompilerParams(
            dimension_semantics=("parallel", "parallel"),
            vmem_limit_bytes=limit),
        cost_estimate=cost,
    )(c2d, wk.astype(jnp.bfloat16), bk.astype(jnp.float32),
      wv.astype(jnp.bfloat16), bv.astype(jnp.float32))


# ----------------------------------------------------------------------------
# Module-level forward (glue in plain JAX, all matmuls in Pallas)
# ----------------------------------------------------------------------------
def latent_kv_attention_forward(h, params, latent_kv_cache=None, *,
                                tm=256, tn=512, out_dtype=jnp.bfloat16,
                                force_tiled=False):
    """h: [B, S, d_model]; optional latent_kv_cache: [B, S_cache, d_latent]."""
    B, S, Dm = h.shape
    Dl = params["w_dkv"].shape[1]
    Dk = params["w_uk"].shape[1]
    Dv = params["w_uv"].shape[1]

    if latent_kv_cache is None:
        # Hot prefill path: single fused kernel, latent never round-trips HBM.
        c2d, k2d, v2d = fused_down_up_pallas(
            h.reshape(B * S, Dm), params, tm=tm, tn=tn,
            out_dtype=out_dtype, force_tiled=force_tiled)
        return (k2d.reshape(B, S, Dk), v2d.reshape(B, S, Dv),
                c2d.reshape(B, S, Dl))

    # Cache path: down-project the (small) new tokens, then one fused dual
    # up-projection pass over the full latent.
    c_new = linear_pallas(h.reshape(B * S, Dm), params["w_dkv"],
                          params["b_dkv"], tm=tm,
                          out_dtype=out_dtype).reshape(B, S, Dl)
    # TODO(synk): with a preallocated ring-buffer cache API this concat (an
    # O(S_cache) HBM copy per step) plus the full-cache up-projection below
    # could become an in-place tail write (input_output_aliases) + new-rows-only
    # up-projection; the reference module's functional semantics require
    # materializing the full concatenated tensors here.
    c_kv = jnp.concatenate([latent_kv_cache, c_new], axis=-2)
    Bt, St, _ = c_kv.shape
    k2d, v2d = dual_up_pallas(c_kv.reshape(Bt * St, Dl), params, tm=tm, tn=tn,
                              out_dtype=out_dtype, force_tiled=force_tiled)
    return k2d.reshape(Bt, St, Dk), v2d.reshape(Bt, St, Dv), c_kv


# ----------------------------------------------------------------------------
# Parameter init (mimics nn.Linear default U(-1/sqrt(in), 1/sqrt(in))).
# Weights bf16 [in, out]; biases f32 [1, out]; up-proj weights also pre-fused.
# ----------------------------------------------------------------------------
def init_params(key, d_model, d_latent, d_k, d_v):
    ks = jax.random.split(key, 6)

    def lin(kw, kb, din, dout):
        bound = 1.0 / math.sqrt(din)
        w = jax.random.uniform(kw, (din, dout), jnp.float32,
                               minval=-bound, maxval=bound)
        b = jax.random.uniform(kb, (1, dout), jnp.float32,
                               minval=-bound, maxval=bound)
        return w.astype(jnp.bfloat16), b

    w_dkv, b_dkv = lin(ks[0], ks[1], d_model, d_latent)
    w_uk, b_uk = lin(ks[2], ks[3], d_latent, d_k)
    w_uv, b_uv = lin(ks[4], ks[5], d_latent, d_v)
    # Pre-fused up-projection: one long MXU stream per row tile instead of two
    # shorter ones.  Done once at parameter-prep time, never per forward.
    w_ukv = jnp.concatenate([w_uk, w_uv], axis=1)
    b_ukv = jnp.concatenate([b_uk, b_uv], axis=1)
    return dict(w_dkv=w_dkv, b_dkv=b_dkv, w_uk=w_uk, b_uk=b_uk,
                w_uv=w_uv, b_uv=b_uv, w_ukv=w_ukv, b_ukv=b_ukv)


# ----------------------------------------------------------------------------
# Reference for correctness checks (same math: bf16 operands, f32 accumulate)
# ----------------------------------------------------------------------------
def reference_forward(h, params, latent_kv_cache=None):
    def lin(x, w, b):
        y = jnp.dot(x.astype(jnp.bfloat16), w.astype(jnp.bfloat16),
                    preferred_element_type=jnp.float32)
        return y + b.astype(jnp.float32)

    c_new = lin(h, params["w_dkv"], params["b_dkv"])
    if latent_kv_cache is None:
        c_kv = c_new
    else:
        c_kv = jnp.concatenate([latent_kv_cache.astype(jnp.float32), c_new],
                               axis=-2)
    k = lin(c_kv, params["w_uk"], params["b_uk"])
    v = lin(c_kv, params["w_uv"], params["b_uv"])
    return k, v, c_kv


if __name__ == "__main__":
    # Small, lane-friendly shapes consistent with the module's forward.
    B, S, D_MODEL, D_LATENT, D_K, D_V = 2, 8, 256, 128, 256, 256
    S_CACHE = 8

    key = jax.random.PRNGKey(0)
    k_p, k_h, k_c, k_hd, k_cd = jax.random.split(key, 5)

    params = init_params(k_p, D_MODEL, D_LATENT, D_K, D_V)
    h = jax.random.normal(k_h, (B, S, D_MODEL), jnp.float32).astype(jnp.bfloat16)
    cache = jax.random.normal(k_c, (B, S_CACHE, D_LATENT),
                              jnp.float32).astype(jnp.bfloat16)

    def check(got, want, atol, rtol, name):
        got = jnp.asarray(got, jnp.float32)
        want = jnp.asarray(want, jnp.float32)
        assert got.shape == want.shape, f"{name}: shape {got.shape} vs {want.shape}"
        assert jnp.allclose(got, want, atol=atol, rtol=rtol), (
            f"{name}: mismatch (max abs err "
            f"{float(jnp.max(jnp.abs(got - want)))})")

    rk1, rv1, rc1 = reference_forward(h, params, None)

    # Case 1: no cache -> fused kernel, resident weights, single fused KV dot.
    k1, v1, c1 = latent_kv_attention_forward(h, params, None)
    jax.block_until_ready((k1, v1, c1))
    for g, w, n in [(k1, rk1, "k1"), (v1, rv1, "v1"), (c1, rc1, "c1")]:
        check(g, w, 3e-2, 3e-2, n)

    # Case 2: with latent KV cache (down-proj + fused dual up-proj kernels).
    k2, v2, c2 = latent_kv_attention_forward(h, params, cache)
    jax.block_until_ready((k2, v2, c2))
    rk2, rv2, rc2 = reference_forward(h, params, cache)
    for g, w, n in [(k2, rk2, "k2"), (v2, rv2, "v2"), (c2, rc2, "c2")]:
        check(g, w, 3e-2, 3e-2, n)

    # Case 3: force the Dout-tiled fallback (tn=128) -> exercises the j-carry
    # through the resident c output block and lane-tiled weight streaming.
    k3, v3, c3 = latent_kv_attention_forward(h, params, None, tn=128,
                                             force_tiled=True)
    jax.block_until_ready((k3, v3, c3))
    for g, w, n in [(k3, rk1, "k3"), (v3, rv1, "v3"), (c3, rc1, "c3")]:
        check(g, w, 3e-2, 3e-2, n)

    # Case 4: decode-style ragged rows (S_new=1, odd cache length) ->
    # exercises cdiv grids with partial row blocks (no wrapper pad/slice).
    h_dec = jax.random.normal(k_hd, (B, 1, D_MODEL),
                              jnp.float32).astype(jnp.bfloat16)
    cache_dec = jax.random.normal(k_cd, (B, 13, D_LATENT),
                                  jnp.float32).astype(jnp.bfloat16)
    k4, v4, c4 = latent_kv_attention_forward(h_dec, params, cache_dec)
    jax.block_until_ready((k4, v4, c4))
    rk4, rv4, rc4 = reference_forward(h_dec, params, cache_dec)
    for g, w, n in [(k4, rk4, "k4"), (v4, rv4, "v4"), (c4, rc4, "c4")]:
        check(g, w, 3e-2, 3e-2, n)

    assert k1.shape == (B, S, D_K) and v1.shape == (B, S, D_V)
    assert c1.shape == (B, S, D_LATENT)
    assert k2.shape == (B, S + S_CACHE, D_K) and c2.shape == (B, S + S_CACHE, D_LATENT)
    assert k4.shape == (B, 14, D_K) and c4.shape == (B, 14, D_LATENT)
    assert k1.dtype == jnp.bfloat16 and c1.dtype == jnp.bfloat16

    print("KERNEL_OK")
</pallas_src>

<mosaic_0001>
module attributes {stable_mosaic.version = 11 : i64} {
  func.func @kernel(%arg0: i32, %arg1: memref<16x256xbf16, #tpu.memory_space<vmem>>, %arg2: memref<256x128xbf16, #tpu.memory_space<vmem>>, %arg3: memref<1x128xf32, #tpu.memory_space<vmem>>, %arg4: memref<128x512xbf16, #tpu.memory_space<vmem>>, %arg5: memref<1x512xf32, #tpu.memory_space<vmem>>, %arg6: memref<16x128xbf16, #tpu.memory_space<vmem>>, %arg7: memref<16x256xbf16, #tpu.memory_space<vmem>>, %arg8: memref<16x256xbf16, #tpu.memory_space<vmem>>) attributes {dimension_semantics = [#tpu.dimension_semantics<parallel>], iteration_bounds = array<i64: 1>, scalar_prefetch = 0 : i64, scratch_operands = 0 : i64, tpu.core_type = #tpu.core_type<tc>, window_params = [{transform_indices = @transform_0, window_bounds = array<i64: 16, 256>}, {pipeline_mode = #tpu.pipeline_mode<synchronous>, transform_indices = @transform_1, window_bounds = array<i64: 256, 128>}, {pipeline_mode = #tpu.pipeline_mode<synchronous>, transform_indices = @transform_2, window_bounds = array<i64: 1, 128>}, {pipeline_mode = #tpu.pipeline_mode<synchronous>, transform_indices = @transform_3, window_bounds = array<i64: 128, 512>}, {pipeline_mode = #tpu.pipeline_mode<synchronous>, transform_indices = @transform_4, window_bounds = array<i64: 1, 512>}, {transform_indices = @transform_5, window_bounds = array<i64: 16, 128>}, {transform_indices = @transform_6, window_bounds = array<i64: 16, 256>}, {transform_indices = @transform_7, window_bounds = array<i64: 16, 256>}]} {
    %c0 = arith.constant 0 : index
    %c0_0 = arith.constant 0 : index
    %0 = vector.load %arg1[%c0, %c0_0] : memref<16x256xbf16, #tpu.memory_space<vmem>>, vector<16x256xbf16>
    %c0_1 = arith.constant 0 : index
    %c0_2 = arith.constant 0 : index
    %1 = vector.load %arg2[%c0_1, %c0_2] : memref<256x128xbf16, #tpu.memory_space<vmem>>, vector<256x128xbf16>
    %cst = arith.constant dense<0.000000e+00> : vector<16x128xf32>
    %2 = tpu.matmul %0, %1, %cst {dimension_numbers = #tpu.dot_dimension_numbers<[1], [0], [0], [1], [0, 0, 1, 1], [], []>} : vector<16x256xbf16>, vector<256x128xbf16>, vector<16x128xf32> -> vector<16x128xf32>
    %c0_3 = arith.constant 0 : index
    %c0_4 = arith.constant 0 : index
    %3 = vector.load %arg3[%c0_3, %c0_4] : memref<1x128xf32, #tpu.memory_space<vmem>>, vector<1x128xf32>
    %4 = vector.broadcast %3 : vector<1x128xf32> to vector<16x128xf32>
    %5 = arith.addf %2, %4 : vector<16x128xf32>
    %6 = arith.truncf %5 : vector<16x128xf32> to vector<16x128xbf16>
    %c0_5 = arith.constant 0 : index
    %c0_6 = arith.constant 0 : index
    %7 = vector.load %arg6[%c0_5, %c0_6] : memref<16x128xbf16, #tpu.memory_space<vmem>>, vector<16x128xbf16>
    tpu.vector_store %arg6[%c0_5, %c0_6], %6 {strides = array<i32>} : memref<16x128xbf16, #tpu.memory_space<vmem>>, vector<16x128xbf16>,
    %c0_7 = arith.constant 0 : index
    %c0_8 = arith.constant 0 : index
    %8 = vector.load %arg4[%c0_7, %c0_8] : memref<128x512xbf16, #tpu.memory_space<vmem>>, vector<128x512xbf16>
    %cst_9 = arith.constant dense<0.000000e+00> : vector<16x512xf32>
    %9 = tpu.matmul %6, %8, %cst_9 {dimension_numbers = #tpu.dot_dimension_numbers<[1], [0], [0], [1], [0, 0, 1, 1], [], []>} : vector<16x128xbf16>, vector<128x512xbf16>, vector<16x512xf32> -> vector<16x512xf32>
    %c0_10 = arith.constant 0 : index
    %c0_11 = arith.constant 0 : index
    %10 = vector.load %arg5[%c0_10, %c0_11] : memref<1x512xf32, #tpu.memory_space<vmem>>, vector<1x512xf32>
    %11 = vector.broadcast %10 : vector<1x512xf32> to vector<16x512xf32>
    %12 = arith.addf %9, %11 : vector<16x512xf32>
    %13 = vector.extract_strided_slice %12 {offsets = [0, 0], sizes = [16, 256], strides = [1, 1]} : vector<16x512xf32> to vector<16x256xf32>
    %14 = arith.truncf %13 : vector<16x256xf32> to vector<16x256xbf16>
    %c0_12 = arith.constant 0 : index
    %c0_13 = arith.constant 0 : index
    %15 = vector.load %arg7[%c0_12, %c0_13] : memref<16x256xbf16, #tpu.memory_space<vmem>>, vector<16x256xbf16>
    tpu.vector_store %arg7[%c0_12, %c0_13], %14 {strides = array<i32>} : memref<16x256xbf16, #tpu.memory_space<vmem>>, vector<16x256xbf16>,
    %16 = vector.extract_strided_slice %12 {offsets = [0, 256], sizes = [16, 256], strides = [1, 1]} : vector<16x512xf32> to vector<16x256xf32>
    %17 = arith.truncf %16 : vector<16x256xf32> to vector<16x256xbf16>
    %c0_14 = arith.constant 0 : index
    %c0_15 = arith.constant 0 : index
    %18 = vector.load %arg8[%c0_14, %c0_15] : memref<16x256xbf16, #tpu.memory_space<vmem>>, vector<16x256xbf16>
    tpu.vector_store %arg8[%c0_14, %c0_15], %17 {strides = array<i32>} : memref<16x256xbf16, #tpu.memory_space<vmem>>, vector<16x256xbf16>,
    return
  }
  func.func @transform_0(%arg0: i32) -> (i32, i32) {
    %c0_i32 = arith.constant 0 : i32
    %c0_i32_0 = arith.constant 0 : i32
    return %arg0, %c0_i32 : i32, i32
  }
  func.func @transform_1(%arg0: i32) -> (i32, i32) {
    %c0_i32 = arith.constant 0 : i32
    %c0_i32_0 = arith.constant 0 : i32
    %c0_i32_1 = arith.constant 0 : i32
    return %c0_i32, %c0_i32_0 : i32, i32
  }
  func.func @transform_2(%arg0: i32) -> (i32, i32) {
    %c0_i32 = arith.constant 0 : i32
    %c0_i32_0 = arith.constant 0 : i32
    %c0_i32_1 = arith.constant 0 : i32
    return %c0_i32, %c0_i32_0 : i32, i32
  }
  func.func @transform_3(%arg0: i32) -> (i32, i32) {
    %c0_i32 = arith.constant 0 : i32
    %c0_i32_0 = arith.constant 0 : i32
    %c0_i32_1 = arith.constant 0 : i32
    return %c0_i32, %c0_i32_0 : i32, i32
  }
  func.func @transform_4(%arg0: i32) -> (i32, i32) {
    %c0_i32 = arith.constant 0 : i32
    %c0_i32_0 = arith.constant 0 : i32
    %c0_i32_1 = arith.constant 0 : i32
    return %c0_i32, %c0_i32_0 : i32, i32
  }
  func.func @transform_5(%arg0: i32) -> (i32, i32) {
    %c0_i32 = arith.constant 0 : i32
    %c0_i32_0 = arith.constant 0 : i32
    return %arg0, %c0_i32 : i32, i32
  }
  func.func @transform_6(%arg0: i32) -> (i32, i32) {
    %c0_i32 = arith.constant 0 : i32
    %c0_i32_0 = arith.constant 0 : i32
    return %arg0, %c0_i32 : i32, i32
  }
  func.func @transform_7(%arg0: i32) -> (i32, i32) {
    %c0_i32 = arith.constant 0 : i32
    %c0_i32_0 = arith.constant 0 : i32
    return %arg0, %c0_i32 : i32, i32
  }
}

</mosaic_0001>

<llo_original>
// kernel: tpu_custom_call.1
$region0: #{tpu_custom_call.1}
  #allocation0 [shape = 'u32[]', space=smem, size = 0x4, offset = 0x4, fixed_abs, tag = 'smem constant byte address 0x4 - core index']
  #allocation1 [shape = 'u32[144,128]{1,0:T(1,128)}', space=vmem, size = 0x12000, scoped, tag = 'internal scratch']
  %s0 = inlined_call_operand.hbm [shape: bf16[16,256], index: 0, kind: input, shape index: {}]
  %s1 = inlined_call_operand.hbm [shape: bf16[256,128], index: 1, kind: input, shape index: {}]
  %s2 = inlined_call_operand.vmem [shape: f32[1,128], index: 2, kind: input, shape index: {}]
  %s3 = inlined_call_operand.hbm [shape: bf16[128,512], index: 3, kind: input, shape index: {}]
  %s4 = inlined_call_operand.vmem [shape: f32[1,512], index: 4, kind: input, shape index: {}]
  %s5 = inlined_call_operand.hbm [shape: bf16[16,128], index: 5, kind: output, shape index: {0}]
  %s6 = inlined_call_operand.hbm [shape: bf16[16,256], index: 6, kind: output, shape index: {1}]
  %s7 = inlined_call_operand.hbm [shape: bf16[16,256], index: 7, kind: output, shape index: {2}]
  %8 = xla_tuple %s5, %s6, %s7
  %s9 = sld [smem:[#allocation0]]
  $region58: #{tpu_custom_call.1} parent=0
    _
  %s11 = ssub.s32 1, %s9
  %s12 = scalar_select 0, %s11, %s9
  $region1: #{tpu_custom_call.1} parent=0
    #allocation2 [shape = 'u8[8192]{0}', space=vmem, size = 0x2000, scoped, tag = 'input window, operand 0, single buffered']
    #allocation3 [shape = 's32[1]{0}', space=sflag, size = 0x4, scoped, tag = 'scoped memory for tpu_custom_call.1']
    #allocation4 [shape = 's32[1]{0}', space=sflag, size = 0x4, scoped, tag = 'scoped memory for tpu_custom_call.1']
    #allocation5 [shape = 'u8[65536]{0}', space=vmem, size = 0x10000, scoped, tag = 'input window, operand 1, single buffered']
    #allocation6 [shape = 's32[1]{0}', space=sflag, size = 0x4, scoped, tag = 'scoped memory for tpu_custom_call.1']
    #allocation7 [shape = 'u8[131072]{0}', space=vmem, size = 0x20000, scoped, tag = 'input window, operand 3, single buffered']
    #allocation8 [shape = 'u8[4096]{0}', space=vmem, size = 0x1000, scoped, tag = 'output window, operand 0, single buffered']
    #allocation9 [shape = 'u8[8192]{0}', space=vmem, size = 0x2000, scoped, tag = 'output window, operand 1, single buffered']
    #allocation10 [shape = 's32[1]{0}', space=sflag, size = 0x4, scoped, tag = 'scoped memory for tpu_custom_call.1']
    #allocation11 [shape = 'u8[8192]{0}', space=vmem, size = 0x2000, scoped, tag = 'output window, operand 2, single buffered']
    %13 = vsyncpa [#allocation3], 0
    %14 = vsyncpa [#allocation6], 0
    %15 = vsyncpa [#allocation4], 0
    %16 = vsyncpa [#allocation10], 0
    // Predicated region
    $region2: #{tpu_custom_call.1} parent=1 // pred_check
      _
    $region3: #{tpu_custom_call.1} parent=1 // pred_check_branch
      %18 = sbr.rel (0) target = $region5
    $region4: #{tpu_custom_call.1} parent=1 // pred_region
      %s20 = ssub.s32 256, 256
      %21 = vsyncadd [#allocation3], %s20
      %s22 = sshll.u32 [#allocation2], 4
      %s23 = int_to_ptr.vmem [resolvable:$true] %s22
      %28 = dma.hbm_to_vmem [thread:$0]  %s0, 256, %s23, [#allocation3], 128, 128, 8
    $region5: #{tpu_custom_call.1} parent=1 // pred_fallthru
      _
    // Predicated region
    $region6: #{tpu_custom_call.1} parent=1 // pred_check
      _
    $region7: #{tpu_custom_call.1} parent=1 // pred_check_branch
      %30 = sbr.rel (0) target = $region9
    $region8: #{tpu_custom_call.1} parent=1 // pred_region
      %s32 = ssub.s32 2048, 2048
      %33 = vsyncadd [#allocation6], %s32
      %s34 = sshll.u32 [#allocation5], 4
      %s35 = int_to_ptr.vmem [resolvable:$true] %s34
      %40 = dma.hbm_to_vmem [thread:$0]  %s1, 2048, %s35, [#allocation6], 64, 64, 4
    $region9: #{tpu_custom_call.1} parent=1 // pred_fallthru
      _
    // Predicated region
    $region10: #{tpu_custom_call.1} parent=1 // pred_check
      _
    $region11: #{tpu_custom_call.1} parent=1 // pred_check_branch
      %42 = sbr.rel (0) target = $region13
    $region12: #{tpu_custom_call.1} parent=1 // pred_region
      _
    $region13: #{tpu_custom_call.1} parent=1 // pred_fallthru
      _
    // Predicated region
    $region14: #{tpu_custom_call.1} parent=1 // pred_check
      _
    $region15: #{tpu_custom_call.1} parent=1 // pred_check_branch
      %44 = sbr.rel (0) target = $region17
    $region16: #{tpu_custom_call.1} parent=1 // pred_region
      %s46 = ssub.s32 4096, 4096
      %47 = vsyncadd [#allocation6], %s46
      %s48 = sshll.u32 [#allocation7], 4
      %s49 = int_to_ptr.vmem [resolvable:$true] %s48
      %54 = dma.hbm_to_vmem [thread:$0]  %s3, 4096, %s49, [#allocation6], 256, 256, 16
    $region17: #{tpu_custom_call.1} parent=1 // pred_fallthru
      _
    // Predicated region
    $region18: #{tpu_custom_call.1} parent=1 // pred_check
      _
    $region19: #{tpu_custom_call.1} parent=1 // pred_check_branch
      %56 = sbr.rel (0) target = $region21
    $region20: #{tpu_custom_call.1} parent=1 // pred_region
      _
    $region21: #{tpu_custom_call.1} parent=1 // pred_fallthru
      _
    // Predicated region
    $region22: #{tpu_custom_call.1} parent=1 // pred_check
      _
    $region23: #{tpu_custom_call.1} parent=1 // pred_check_branch
      %58 = sbr.rel (0) target = $region25
    $region24: #{tpu_custom_call.1} parent=1 // pred_region
      %59 = dma.done [#allocation3], 256
    $region25: #{tpu_custom_call.1} parent=1 // pred_fallthru
      _
    // Predicated region
    $region26: #{tpu_custom_call.1} parent=1 // pred_check
      _
    $region27: #{tpu_custom_call.1} parent=1 // pred_check_branch
      %61 = sbr.rel (0) target = $region29
    $region28: #{tpu_custom_call.1} parent=1 // pred_region
      %62 = dma.done [#allocation6], 2048
    $region29: #{tpu_custom_call.1} parent=1 // pred_fallthru
      _
    // Predicated region
    $region30: #{tpu_custom_call.1} parent=1 // pred_check
      _
    $region31: #{tpu_custom_call.1} parent=1 // pred_check_branch
      %64 = sbr.rel (0) target = $region33
    $region32: #{tpu_custom_call.1} parent=1 // pred_region
      %65 = dma.done [#allocation6], 4096
    $region33: #{tpu_custom_call.1} parent=1 // pred_fallthru
      _
    %v67 = vld [vmem:[#allocation2] sm:$0xff]
    %v68 = vld [vmem:[#allocation2 + $0x8] sm:$0xff]
    %v69 = vld [vmem:[#allocation5] sm:$0xf]
    %v70 = vld [vmem:[#allocation5 + $0x4] sm:$0xf]
    %v71 = vld [vmem:[#allocation5 + $0x8] sm:$0xf]
    %v72 = vld [vmem:[#allocation5 + $0xc] sm:$0xf]
    %v73 = vld [vmem:[#allocation5 + $0x10] sm:$0xf]
    %v74 = vld [vmem:[#allocation5 + $0x14] sm:$0xf]
    %v75 = vld [vmem:[#allocation5 + $0x18] sm:$0xf]
    %v76 = vld [vmem:[#allocation5 + $0x1c] sm:$0xf]
    %v77 = vld [vmem:[#allocation5 + $0x20] sm:$0xf]
    %v78 = vld [vmem:[#allocation5 + $0x24] sm:$0xf]
    %v79 = vld [vmem:[#allocation5 + $0x28] sm:$0xf]
    %v80 = vld [vmem:[#allocation5 + $0x2c] sm:$0xf]
    %v81 = vld [vmem:[#allocation5 + $0x30] sm:$0xf]
    %v82 = vld [vmem:[#allocation5 + $0x34] sm:$0xf]
    %v83 = vld [vmem:[#allocation5 + $0x38] sm:$0xf]
    %v84 = vld [vmem:[#allocation5 + $0x3c] sm:$0xf]
    %v85 = vld [vmem:[#allocation5 + $0x40] sm:$0xf]
    %v86 = vld [vmem:[#allocation5 + $0x44] sm:$0xf]
    %v87 = vld [vmem:[#allocation5 + $0x48] sm:$0xf]
    %v88 = vld [vmem:[#allocation5 + $0x4c] sm:$0xf]
    %v89 = vld [vmem:[#allocation5 + $0x50] sm:$0xf]
    %v90 = vld [vmem:[#allocation5 + $0x54] sm:$0xf]
    %v91 = vld [vmem:[#allocation5 + $0x58] sm:$0xf]
    %v92 = vld [vmem:[#allocation5 + $0x5c] sm:$0xf]
    %v93 = vld [vmem:[#allocation5 + $0x60] sm:$0xf]
    %v94 = vld [vmem:[#allocation5 + $0x64] sm:$0xf]
    %v95 = vld [vmem:[#allocation5 + $0x68] sm:$0xf]
    %v96 = vld [vmem:[#allocation5 + $0x6c] sm:$0xf]
    %v97 = vld [vmem:[#allocation5 + $0x70] sm:$0xf]
    %v98 = vld [vmem:[#allocation5 + $0x74] sm:$0xf]
    %v99 = vld [vmem:[#allocation5 + $0x78] sm:$0xf]
    %v100 = vld [vmem:[#allocation5 + $0x7c] sm:$0xf]
    %v101 = vld [vmem:[%s2] sm:$0x1]
    %v103 = vlaneseq
    %v104 = vshrl.u32 %v103, 7
    %v105 = vsub.s32 0, %v104
    %v106 = vrot.slane %v101, %v105
    %v110 = vunpack.c.l.b16 %v67
    %v111 = vunpack.c.h.b16 %v67
    %v112 = vunpack.c.l.b16 %v68
    %v113 = vunpack.c.h.b16 %v68
    %v114 = vpack.c.b16 %v112, %v110
    %v115 = vpack.c.b16 %v113, %v111
    %v150 = vunpack.c.l.b16 %v69
    %v151 = vunpack.c.l.b16 %v70
    %v152 = vunpack.c.l.b16 %v71
    %v153 = vunpack.c.l.b16 %v72
    %v154 = vunpack.c.l.b16 %v73
    %v155 = vunpack.c.l.b16 %v74
    %v156 = vunpack.c.l.b16 %v75
    %v157 = vunpack.c.l.b16 %v76
    %v158 = vunpack.c.l.b16 %v77
    %v159 = vunpack.c.l.b16 %v78
    %v160 = vunpack.c.l.b16 %v79
    %v161 = vunpack.c.l.b16 %v80
    %v162 = vunpack.c.l.b16 %v81
    %v163 = vunpack.c.l.b16 %v82
    %v164 = vunpack.c.l.b16 %v83
    %v165 = vunpack.c.l.b16 %v84
    %v166 = vunpack.c.l.b16 %v85
    %v167 = vunpack.c.l.b16 %v86
    %v168 = vunpack.c.l.b16 %v87
    %v169 = vunpack.c.l.b16 %v88
    %v170 = vunpack.c.l.b16 %v89
    %v171 = vunpack.c.l.b16 %v90
    %v172 = vunpack.c.l.b16 %v91
    %v173 = vunpack.c.l.b16 %v92
    %v174 = vunpack.c.l.b16 %v93
    %v175 = vunpack.c.l.b16 %v94
    %v176 = vunpack.c.l.b16 %v95
    %v177 = vunpack.c.l.b16 %v96
    %v178 = vunpack.c.l.b16 %v97
    %v179 = vunpack.c.l.b16 %v98
    %v180 = vunpack.c.l.b16 %v99
    %v181 = vunpack.c.l.b16 %v100
    %v182 = vpack.c.b16 %v151, %v150
    %v183 = vpack.c.b16 %v153, %v152
    %v184 = vpack.c.b16 %v155, %v154
    %v185 = vpack.c.b16 %v157, %v156
    %v186 = vpack.c.b16 %v159, %v158
    %v187 = vpack.c.b16 %v161, %v160
    %v188 = vpack.c.b16 %v163, %v162
    %v189 = vpack.c.b16 %v165, %v164
    %v190 = vpack.c.b16 %v167, %v166
    %v191 = vpack.c.b16 %v169, %v168
    %v192 = vpack.c.b16 %v171, %v170
    %v193 = vpack.c.b16 %v173, %v172
    %v194 = vpack.c.b16 %v175, %v174
    %v195 = vpack.c.b16 %v177, %v176
    %v196 = vpack.c.b16 %v179, %v178
    %v197 = vpack.c.b16 %v181, %v180
    %214 = vmatprep.subr.bf16.mxu0 0
    %215 = vmatpush1.bf16.msra.mxu0 %v182
    %216 = vmatprep.subr.bf16.mxu0 0
    %217 = vmatpush1.bf16.msra.mxu0 %v183
    %218 = vmatprep.subr.bf16.mxu0 0
    %219 = vmatpush1.bf16.msra.mxu0 %v184
    %220 = vmatprep.subr.bf16.mxu0 0
    %221 = vmatpush1.bf16.msra.mxu0 %v185
    %222 = vmatprep.subr.bf16.mxu0 0
    %223 = vmatpush1.bf16.msra.mxu0 %v186
    %224 = vmatprep.subr.bf16.mxu0 0
    %225 = vmatpush1.bf16.msra.mxu0 %v187
    %226 = vmatprep.subr.bf16.mxu0 0
    %227 = vmatpush1.bf16.msra.mxu0 %v188
    %228 = vmatprep.subr.bf16.mxu0 0
    %229 = vmatpush1.bf16.msra.mxu0 %v189
    %230 = vmatprep.subr.bf16.mxu0 0
    %231 = vmatpush1.bf16.msra.mxu0 %v190
    %232 = vmatprep.subr.bf16.mxu0 0
    %233 = vmatpush1.bf16.msra.mxu0 %v191
    %234 = vmatprep.subr.bf16.mxu0 0
    %235 = vmatpush1.bf16.msra.mxu0 %v192
    %236 = vmatprep.subr.bf16.mxu0 0
    %237 = vmatpush1.bf16.msra.mxu0 %v193
    %238 = vmatprep.subr.bf16.mxu0 0
    %239 = vmatpush1.bf16.msra.mxu0 %v194
    %240 = vmatprep.subr.bf16.mxu0 0
    %241 = vmatpush1.bf16.msra.mxu0 %v195
    %242 = vmatprep.subr.bf16.mxu0 0
    %243 = vmatpush1.bf16.msra.mxu0 %v196
    %244 = vmatprep.subr.bf16.mxu0 0
    %245 = vmatpush1.bf16.msra.mxu0 %v197
    %246 = vmatprep.mubr.bf16.mxu0 %v115
    %247 = vmatmul.mubr.bf16.gmra.mrb[0].mxu0 %v114
    %v248 = vpop.f32.mrb[0].mxu0
    %v249 = vadd.f32 %v106, %v248
    %v250 = vpop.f32.mrb[0].mxu0
    %v251 = vpop.f32.mrb[0].mxu0
    %v252 = vadd.f32 %v106, %v251
    %v253 = vpop.f32.mrb[0].mxu0
    %254 = vdwg.mxu0
    %v255 = vpack.c.bf16 %v252, %v249
    %v257 = vunpack.c.l.b16 %v255
    %v258 = vunpack.c.h.b16 %v255
    %v259 = vpack.c.b16 %v257, %v257
    %v260 = vpack.c.b16 %v258, %v258
    %263 = vst [vmem:[#allocation8] sm:$0xf] %v259
    %264 = vst [vmem:[#allocation8 + $0x4] sm:$0xf] %v260
    %v265 = vld [vmem:[#allocation7] sm:$0xff]
    %v266 = vld [vmem:[#allocation7 + $0x8] sm:$0xff]
    %v267 = vld [vmem:[#allocation7 + $0x10] sm:$0xff]
    %v268 = vld [vmem:[#allocation7 + $0x18] sm:$0xff]
    %v269 = vld [vmem:[#allocation7 + $0x20] sm:$0xff]
    %v270 = vld [vmem:[#allocation7 + $0x28] sm:$0xff]
    %v271 = vld [vmem:[#allocation7 + $0x30] sm:$0xff]
    %v272 = vld [vmem:[#allocation7 + $0x38] sm:$0xff]
    %v273 = vld [vmem:[#allocation7 + $0x40] sm:$0xff]
    %v274 = vld [vmem:[#allocation7 + $0x48] sm:$0xff]
    %v275 = vld [vmem:[#allocation7 + $0x50] sm:$0xff]
    %v276 = vld [vmem:[#allocation7 + $0x58] sm:$0xff]
    %v277 = vld [vmem:[#allocation7 + $0x60] sm:$0xff]
    %v278 = vld [vmem:[#allocation7 + $0x68] sm:$0xff]
    %v279 = vld [vmem:[#allocation7 + $0x70] sm:$0xff]
    %v280 = vld [vmem:[#allocation7 + $0x78] sm:$0xff]
    %v281 = vld [vmem:[#allocation7 + $0x80] sm:$0xff]
    %v282 = vld [vmem:[#allocation7 + $0x88] sm:$0xff]
    %v283 = vld [vmem:[#allocation7 + $0x90] sm:$0xff]
    %v284 = vld [vmem:[#allocation7 + $0x98] sm:$0xff]
    %v285 = vld [vmem:[#allocation7 + $0xa0] sm:$0xff]
    %v286 = vld [vmem:[#allocation7 + $0xa8] sm:$0xff]
    %v287 = vld [vmem:[#allocation7 + $0xb0] sm:$0xff]
    %v288 = vld [vmem:[#allocation7 + $0xb8] sm:$0xff]
    %v289 = vld [vmem:[#allocation7 + $0xc0] sm:$0xff]
    %v290 = vld [vmem:[#allocation7 + $0xc8] sm:$0xff]
    %v291 = vld [vmem:[#allocation7 + $0xd0] sm:$0xff]
    %v292 = vld [vmem:[#allocation7 + $0xd8] sm:$0xff]
    %v293 = vld [vmem:[#allocation7 + $0xe0] sm:$0xff]
    %v294 = vld [vmem:[#allocation7 + $0xe8] sm:$0xff]
    %v295 = vld [vmem:[#allocation7 + $0xf0] sm:$0xff]
    %v296 = vld [vmem:[#allocation7 + $0xf8] sm:$0xff]
    %v297 = vld [vmem:[%s4] sm:$0xf]
    %v299 = vlaneseq
    %v300 = vshrl.u32 %v299, 7
    %v301 = vsub.s32 0, %v300
    %v302 = vrot.slane %v297, %v301
    %v303 = vlaneseq
    %v304 = vshrl.u32 %v303, 7
    %v305 = vsub.s32 1, %v304
    %v306 = vrot.slane %v297, %v305
    %v307 = vlaneseq
    %v308 = vshrl.u32 %v307, 7
    %v309 = vsub.s32 2, %v308
    %v310 = vrot.slane %v297, %v309
    %v311 = vlaneseq
    %v312 = vshrl.u32 %v311, 7
    %v313 = vsub.s32 3, %v312
    %v314 = vrot.slane %v297, %v313
    %v351 = vunpack.c.l.b16 %v265
    %v352 = vunpack.c.h.b16 %v265
    %v353 = vunpack.c.l.b16 %v266
    %v354 = vunpack.c.h.b16 %v266
    %v355 = vunpack.c.l.b16 %v267
    %v356 = vunpack.c.h.b16 %v267
    %v357 = vunpack.c.l.b16 %v268
    %v358 = vunpack.c.h.b16 %v268
    %v359 = vunpack.c.l.b16 %v269
    %v360 = vunpack.c.h.b16 %v269
    %v361 = vunpack.c.l.b16 %v270
    %v362 = vunpack.c.h.b16 %v270
    %v363 = vunpack.c.l.b16 %v271
    %v364 = vunpack.c.h.b16 %v271
    %v365 = vunpack.c.l.b16 %v272
    %v366 = vunpack.c.h.b16 %v272
    %v367 = vunpack.c.l.b16 %v273
    %v368 = vunpack.c.h.b16 %v273
    %v369 = vunpack.c.l.b16 %v274
    %v370 = vunpack.c.h.b16 %v274
    %v371 = vunpack.c.l.b16 %v275
    %v372 = vunpack.c.h.b16 %v275
    %v373 = vunpack.c.l.b16 %v276
    %v374 = vunpack.c.h.b16 %v276
    %v375 = vunpack.c.l.b16 %v277
    %v376 = vunpack.c.h.b16 %v277
    %v377 = vunpack.c.l.b16 %v278
    %v378 = vunpack.c.h.b16 %v278
    %v379 = vunpack.c.l.b16 %v279
    %v380 = vunpack.c.h.b16 %v279
    %v381 = vunpack.c.l.b16 %v280
    %v382 = vunpack.c.h.b16 %v280
    %v383 = vunpack.c.l.b16 %v281
    %v384 = vunpack.c.h.b16 %v281
    %v385 = vunpack.c.l.b16 %v282
    %v386 = vunpack.c.h.b16 %v282
    %v387 = vunpack.c.l.b16 %v283
    %v388 = vunpack.c.h.b16 %v283
    %v389 = vunpack.c.l.b16 %v284
    %v390 = vunpack.c.h.b16 %v284
    %v391 = vunpack.c.l.b16 %v285
    %v392 = vunpack.c.h.b16 %v285
    %v393 = vunpack.c.l.b16 %v286
    %v394 = vunpack.c.h.b16 %v286
    %v395 = vunpack.c.l.b16 %v287
    %v396 = vunpack.c.h.b16 %v287
    %v397 = vunpack.c.l.b16 %v288
    %v398 = vunpack.c.h.b16 %v288
    %v399 = vunpack.c.l.b16 %v289
    %v400 = vunpack.c.h.b16 %v289
    %v401 = vunpack.c.l.b16 %v290
    %v402 = vunpack.c.h.b16 %v290
    %v403 = vunpack.c.l.b16 %v291
    %v404 = vunpack.c.h.b16 %v291
    %v405 = vunpack.c.l.b16 %v292
    %v406 = vunpack.c.h.b16 %v292
    %v407 = vunpack.c.l.b16 %v293
    %v408 = vunpack.c.h.b16 %v293
    %v409 = vunpack.c.l.b16 %v294
    %v410 = vunpack.c.h.b16 %v294
    %v411 = vunpack.c.l.b16 %v295
    %v412 = vunpack.c.h.b16 %v295
    %v413 = vunpack.c.l.b16 %v296
    %v414 = vunpack.c.h.b16 %v296
    %v415 = vpack.c.b16 %v355, %v351
    %v416 = vpack.c.b16 %v356, %v352
    %v417 = vpack.c.b16 %v357, %v353
    %v418 = vpack.c.b16 %v358, %v354
    %v419 = vpack.c.b16 %v363, %v359
    %v420 = vpack.c.b16 %v364, %v360
    %v421 = vpack.c.b16 %v365, %v361
    %v422 = vpack.c.b16 %v366, %v362
    %v423 = vpack.c.b16 %v371, %v367
    %v424 = vpack.c.b16 %v372, %v368
    %v425 = vpack.c.b16 %v373, %v369
    %v426 = vpack.c.b16 %v374, %v370
    %v427 = vpack.c.b16 %v379, %v375
    %v428 = vpack.c.b16 %v380, %v376
    %v429 = vpack.c.b16 %v381, %v377
    %v430 = vpack.c.b16 %v382, %v378
    %v431 = vpack.c.b16 %v387, %v383
    %v432 = vpack.c.b16 %v388, %v384
    %v433 = vpack.c.b16 %v389, %v385
    %v434 = vpack.c.b16 %v390, %v386
    %v435 = vpack.c.b16 %v395, %v391
    %v436 = vpack.c.b16 %v396, %v392
    %v437 = vpack.c.b16 %v397, %v393
    %v438 = vpack.c.b16 %v398, %v394
    %v439 = vpack.c.b16 %v403, %v399
    %v440 = vpack.c.b16 %v404, %v400
    %v441 = vpack.c.b16 %v405, %v401
    %v442 = vpack.c.b16 %v406, %v402
    %v443 = vpack.c.b16 %v411, %v407
    %v444 = vpack.c.b16 %v412, %v408
    %v445 = vpack.c.b16 %v413, %v409
    %v446 = vpack.c.b16 %v414, %v410
    %479 = vmatprep.subr.bf16.mxu0 %v416
    %480 = vmatpush1.bf16.msra.mxu0 %v415
    %481 = vmatprep.subr.bf16.mxu0 %v420
    %482 = vmatpush1.bf16.msra.mxu0 %v419
    %483 = vmatprep.subr.bf16.mxu0 %v424
    %484 = vmatpush1.bf16.msra.mxu0 %v423
    %485 = vmatprep.subr.bf16.mxu0 %v428
    %486 = vmatpush1.bf16.msra.mxu0 %v427
    %487 = vmatprep.subr.bf16.mxu0 %v432
    %488 = vmatpush1.bf16.msra.mxu0 %v431
    %489 = vmatprep.subr.bf16.mxu0 %v436
    %490 = vmatpush1.bf16.msra.mxu0 %v435
    %491 = vmatprep.subr.bf16.mxu0 %v440
    %492 = vmatpush1.bf16.msra.mxu0 %v439
    %493 = vmatprep.subr.bf16.mxu0 %v444
    %494 = vmatpush1.bf16.msra.mxu0 %v443
    %495 = vmatprep.subr.bf16.mxu0 0
    %496 = vmatpush1.bf16.msra.mxu0 0
    %497 = vmatprep.subr.bf16.mxu0 0
    %498 = vmatpush1.bf16.msra.mxu0 0
    %499 = vmatprep.subr.bf16.mxu0 0
    %500 = vmatpush1.bf16.msra.mxu0 0
    %501 = vmatprep.subr.bf16.mxu0 0
    %502 = vmatpush1.bf16.msra.mxu0 0
    %503 = vmatprep.subr.bf16.mxu0 0
    %504 = vmatpush1.bf16.msra.mxu0 0
    %505 = vmatprep.subr.bf16.mxu0 0
    %506 = vmatpush1.bf16.msra.mxu0 0
    %507 = vmatprep.subr.bf16.mxu0 0
    %508 = vmatpush1.bf16.msra.mxu0 0
    %509 = vmatprep.subr.bf16.mxu0 0
    %510 = vmatpush1.bf16.msra.mxu0 0
    %511 = vmatprep.mubr.bf16.mxu0 0
    %512 = vmatmul.mubr.bf16.gmra.mrb[0].mxu0 %v255
    %v513 = vpop.f32.mrb[0].mxu0
    %v514 = vadd.f32 %v302, %v513
    %v515 = vpop.f32.mrb[0].mxu0
    %v516 = vadd.f32 %v306, %v515
    %v517 = vpop.f32.mrb[0].mxu0
    %v518 = vadd.f32 %v302, %v517
    %v519 = vpop.f32.mrb[0].mxu0
    %v520 = vadd.f32 %v306, %v519
    %521 = vdwg.mxu0
    %522 = vmatprep.subr.bf16.mxu0 %v418
    %523 = vmatpush1.bf16.msra.mxu0 %v417
    %524 = vmatprep.subr.bf16.mxu0 %v422
    %525 = vmatpush1.bf16.msra.mxu0 %v421
    %526 = vmatprep.subr.bf16.mxu0 %v426
    %527 = vmatpush1.bf16.msra.mxu0 %v425
    %528 = vmatprep.subr.bf16.mxu0 %v430
    %529 = vmatpush1.bf16.msra.mxu0 %v429
    %530 = vmatprep.subr.bf16.mxu0 %v434
    %531 = vmatpush1.bf16.msra.mxu0 %v433
    %532 = vmatprep.subr.bf16.mxu0 %v438
    %533 = vmatpush1.bf16.msra.mxu0 %v437
    %534 = vmatprep.subr.bf16.mxu0 %v442
    %535 = vmatpush1.bf16.msra.mxu0 %v441
    %536 = vmatprep.subr.bf16.mxu0 %v446
    %537 = vmatpush1.bf16.msra.mxu0 %v445
    %538 = vmatprep.subr.bf16.mxu0 0
    %539 = vmatpush1.bf16.msra.mxu0 0
    %540 = vmatprep.subr.bf16.mxu0 0
    %541 = vmatpush1.bf16.msra.mxu0 0
    %542 = vmatprep.subr.bf16.mxu0 0
    %543 = vmatpush1.bf16.msra.mxu0 0
    %544 = vmatprep.subr.bf16.mxu0 0
    %545 = vmatpush1.bf16.msra.mxu0 0
    %546 = vmatprep.subr.bf16.mxu0 0
    %547 = vmatpush1.bf16.msra.mxu0 0
    %548 = vmatprep.subr.bf16.mxu0 0
    %549 = vmatpush1.bf16.msra.mxu0 0
    %550 = vmatprep.subr.bf16.mxu0 0
    %551 = vmatpush1.bf16.msra.mxu0 0
    %552 = vmatprep.subr.bf16.mxu0 0
    %553 = vmatpush1.bf16.msra.mxu0 0
    %554 = vmatprep.mubr.bf16.mxu0 0
    %555 = vmatmul.mubr.bf16.gmra.mrb[0].mxu0 %v255
    %v556 = vpop.f32.mrb[0].mxu0
    %v557 = vadd.f32 %v310, %v556
    %v558 = vpop.f32.mrb[0].mxu0
    %v559 = vadd.f32 %v314, %v558
    %v560 = vpop.f32.mrb[0].mxu0
    %v561 = vadd.f32 %v310, %v560
    %v562 = vpop.f32.mrb[0].mxu0
    %v563 = vadd.f32 %v314, %v562
    %564 = vdwg.mxu0
    %v565 = vpack.c.bf16 %v518, %v514
    %v566 = vpack.c.bf16 %v520, %v516
    %v569 = vunpack.c.l.b16 %v565
    %v570 = vunpack.c.l.b16 %v566
    %v571 = vunpack.c.h.b16 %v565
    %v572 = vunpack.c.h.b16 %v566
    %v573 = vpack.c.b16 %v570, %v569
    %v574 = vpack.c.b16 %v572, %v571
    %577 = vst [vmem:[#allocation9] sm:$0xff] %v573
    %578 = vst [vmem:[#allocation9 + $0x8] sm:$0xff] %v574
    %v579 = vpack.c.bf16 %v561, %v557
    %v580 = vpack.c.bf16 %v563, %v559
    %v583 = vunpack.c.l.b16 %v579
    %v584 = vunpack.c.l.b16 %v580
    %v585 = vunpack.c.h.b16 %v579
    %v586 = vunpack.c.h.b16 %v580
    %v587 = vpack.c.b16 %v584, %v583
    %v588 = vpack.c.b16 %v586, %v585
    %591 = vst [vmem:[#allocation11] sm:$0xff] %v587
    %592 = vst [vmem:[#allocation11 + $0x8] sm:$0xff] %v588
    // Predicated region
    $region34: #{tpu_custom_call.1} parent=1 // pred_check
      _
    $region35: #{tpu_custom_call.1} parent=1 // pred_check_branch
      %594 = sbr.rel (0) target = $region37
    $region36: #{tpu_custom_call.1} parent=1 // pred_region
      %s596 = ssub.s32 128, 128
      %597 = vsyncadd [#allocation4], %s596
      %s598 = sshll.u32 [#allocation8], 4
      %s599 = int_to_ptr.vmem [resolvable:$true] %s598
      %604 = dma.vmem_to_hbm [thread:$0]  %s599, 128, %s5, [#allocation4], 64, 64, 4
    $region37: #{tpu_custom_call.1} parent=1 // pred_fallthru
      _
    // Predicated region
    $region38: #{tpu_custom_call.1} parent=1 // pred_check
      _
    $region39: #{tpu_custom_call.1} parent=1 // pred_check_branch
      %606 = sbr.rel (0) target = $region41
    $region40: #{tpu_custom_call.1} parent=1 // pred_region
      %s608 = ssub.s32 256, 256
      %609 = vsyncadd [#allocation10], %s608
      %s610 = sshll.u32 [#allocation9], 4
      %s611 = int_to_ptr.vmem [resolvable:$true] %s610
      %616 = dma.vmem_to_hbm [thread:$0]  %s611, 256, %s6, [#allocation10], 128, 128, 8
    $region41: #{tpu_custom_call.1} parent=1 // pred_fallthru
      _
    // Predicated region
    $region42: #{tpu_custom_call.1} parent=1 // pred_check
      _
    $region43: #{tpu_custom_call.1} parent=1 // pred_check_branch
      %618 = sbr.rel (0) target = $region45
    $region44: #{tpu_custom_call.1} parent=1 // pred_region
      %s620 = ssub.s32 256, 256
      %621 = vsyncadd [#allocation10], %s620
      %s622 = sshll.u32 [#allocation11], 4
      %s623 = int_to_ptr.vmem [resolvable:$true] %s622
      %628 = dma.vmem_to_hbm [thread:$0]  %s623, 256, %s7, [#allocation10], 128, 128, 8
    $region45: #{tpu_custom_call.1} parent=1 // pred_fallthru
      _
    // Predicated region
    $region46: #{tpu_custom_call.1} parent=1 // pred_check
      _
    $region47: #{tpu_custom_call.1} parent=1 // pred_check_branch
      %630 = sbr.rel (0) target = $region49
    $region48: #{tpu_custom_call.1} parent=1 // pred_region
      %631 = dma.done [#allocation4], 128
    $region49: #{tpu_custom_call.1} parent=1 // pred_fallthru
      _
    // Predicated region
    $region50: #{tpu_custom_call.1} parent=1 // pred_check
      _
    $region51: #{tpu_custom_call.1} parent=1 // pred_check_branch
      %633 = sbr.rel (0) target = $region53
    $region52: #{tpu_custom_call.1} parent=1 // pred_region
      %634 = dma.done [#allocation10], 256
    $region53: #{tpu_custom_call.1} parent=1 // pred_fallthru
      _
    // Predicated region
    $region54: #{tpu_custom_call.1} parent=1 // pred_check
      _
    $region55: #{tpu_custom_call.1} parent=1 // pred_check_branch
      %636 = sbr.rel (0) target = $region57
    $region56: #{tpu_custom_call.1} parent=1 // pred_region
      %637 = dma.done [#allocation10], 256
    $region57: #{tpu_custom_call.1} parent=1 // pred_fallthru
      _
    %638 = vsyncpa [#allocation3], 1
    %639 = vsyncpa [#allocation6], 1
    %640 = vsyncpa [#allocation4], 1
    %641 = vsyncpa [#allocation10], 1

</llo_original>
